<compile_context>
chip_gen: v5e
topology: v5e:2x2
jax: 0.10.0
libtpu: 0.0.40
codegen_flags: <defaults>
</compile_context>

<pallas_src>
import functools

import jax
import jax.numpy as jnp
from jax.experimental import pallas as pl
from jax.experimental.pallas import tpu as pltpu


# ----------------------------- helpers ---------------------------------------


def _pick_block(dim: int, align: int, target: int) -> int:
    """Largest block <= target that is a multiple of `align` AND divides `dim`.

    Falls back to the full extent (always a legal block shape) when `dim` is not
    `align`-aligned or already fits in one block, so no padding / masked stores are
    ever needed.
    """
    target = max(target, align)
    if dim % align != 0 or dim <= target:
        return dim
    d = (target // align) * align
    while d > align and dim % d != 0:
        d -= align
    return d


# ----------------------------- Pallas kernel --------------------------------


def _adaround_kernel(x_ref, h_ref, p_ref, o_ref, *, soft_targets, gamma, zeta):
    """Elementwise AdaRound forward on one (block_oc, block_k) tile.

    p_ref: (block_oc, 4) packed per-channel params [1/delta, delta, lo, hi].
    h_ref: f32 alpha (soft targets) or int8 {0,1} hard-rounding mask.
    """
    p = p_ref[...]
    inv_delta = p[:, 0:1]          # (block_oc, 1) -> broadcasts over lanes
    delta = p[:, 1:2]
    lo = p[:, 2:3]                 # = -zero_point
    hi = p[:, 3:4]                 # = n_levels - 1 - zero_point

    x_floor = jnp.floor(x_ref[...] * inv_delta)

    if soft_targets:
        # h(V) = clip(sigmoid(alpha) * (zeta - gamma) + gamma, 0, 1)
        h = jnp.clip(jax.nn.sigmoid(h_ref[...]) * (zeta - gamma) + gamma, 0.0, 1.0)
    else:
        # Precomputed (alpha >= 0) mask, streamed as int8.
        h = h_ref[...].astype(jnp.float32)

    # clip(x_int + zp, 0, n-1) - zp  ==  clip(x_int, -zp, n-1-zp)  (zp folded into lo/hi)
    o_ref[...] = jnp.clip(x_floor + h, lo, hi) * delta


def adaround_forward(x2d, h2d, params, *, soft_targets, gamma=-0.1, zeta=1.1,
                     block_rows=256, block_lanes=2048):
    """x2d: (OC, K) f32.  h2d: (OC, K) f32 alpha (soft) or int8 mask (hard).
    params: (OC, 4) f32 packed [1/delta, delta, -zp, n_levels-1-zp]."""
    oc, k = x2d.shape
    assert h2d.shape == (oc, k)
    assert params.shape == (oc, 4)

    # Sublane alignment of 32 keeps blocks on native tiling for both f32 and the
    # int8 mask stream; lane alignment 128.  Non-aligned dims fall back to full extent.
    sub_align, lane_align = 32, 128
    block_oc = _pick_block(oc, sub_align, block_rows)
    block_k = _pick_block(k, lane_align, block_lanes)

    # v7x has 2 TensorCores: make sure at least one 'parallel' axis has >= 2 steps.
    if (oc // block_oc) * (k // block_k) == 1:
        if block_oc % (2 * sub_align) == 0:
            block_oc //= 2
        elif block_k % (2 * lane_align) == 0:
            block_k //= 2
    grid_oc, grid_k = oc // block_oc, k // block_k

    kernel = functools.partial(_adaround_kernel, soft_targets=soft_targets,
                               gamma=gamma, zeta=zeta)

    tile_spec = pl.BlockSpec((block_oc, block_k), lambda i, j: (i, j))
    # Per-tile param block; constant across the inner K axis so Pallas reuses the DMA.
    param_spec = pl.BlockSpec((block_oc, 4), lambda i, j: (i, 0))

    n_elem = oc * k
    h_bytes = 4 if soft_targets else 1
    cost = pl.CostEstimate(
        flops=8 * n_elem,
        transcendentals=n_elem if soft_targets else 0,
        bytes_accessed=(8 + h_bytes) * n_elem + 16 * oc,
    )

    # Max tile 256 x 2048 f32 = 2 MiB; x + h + out double-buffered + params
    # <= ~13 MiB, safe under the 32 MiB scoped limit on v5e/v6e/v7x.
    # (On v5e/v6e with 128 MiB VMEM, block_rows=512 / vmem_limit 64 MiB is a valid
    #  further bump; NOT carried here so the same config is safe on v7x's 64 MiB.)
    return pl.pallas_call(
        kernel,
        out_shape=jax.ShapeDtypeStruct((oc, k), jnp.float32),
        grid_spec=pltpu.PrefetchScalarGridSpec(
            num_scalar_prefetch=0,
            grid=(grid_oc, grid_k),
            in_specs=[tile_spec, tile_spec, param_spec],
            out_specs=tile_spec,
        ),
        compiler_params=pltpu.CompilerParams(
            dimension_semantics=("parallel", "parallel"),
            vmem_limit_bytes=32 << 20),
        cost_estimate=cost,
    )(x2d, h2d, params)


# ----------------------------- Module-like wrapper ---------------------------


class AdaRoundQuantizerJAX:
    """JAX/Pallas port of AdaRoundQuantizer (round_mode='learned_hard_sigmoid')."""

    def __init__(self, weight_oihw, n_bits=4):
        self.n_bits = n_bits
        self.n_levels = 2 ** n_bits
        self.gamma, self.zeta = -0.1, 1.1
        self.beta = 2.0 / 3.0
        self.soft_targets = False

        oc = weight_oihw.shape[0]
        self._orig_shape = weight_oihw.shape
        w2d = weight_oihw.reshape(oc, -1).astype(jnp.float32)

        # UniformAffineQuantizer-style per-channel asymmetric params (deterministic).
        w_min = jnp.minimum(jnp.min(w2d, axis=1, keepdims=True), 0.0)
        w_max = jnp.maximum(jnp.max(w2d, axis=1, keepdims=True), 0.0)
        self.delta = jnp.maximum((w_max - w_min) / (self.n_levels - 1), 1e-8)
        self.zero_point = jnp.round(-w_min / self.delta)
        self.inv_delta = (1.0 / self.delta).astype(jnp.float32)

        # Packed per-channel params: [1/delta, delta, lo, hi] with zp folded into lo/hi.
        lo = -self.zero_point
        hi = float(self.n_levels - 1) - self.zero_point
        self.params = jnp.concatenate(
            [self.inv_delta, self.delta, lo, hi], axis=1).astype(jnp.float32)

        # init_alpha: invert the rectified sigmoid so that h(alpha) == rounding rest.
        x_floor = jnp.floor(w2d / self.delta)
        rest = w2d / self.delta - x_floor
        self.alpha = (-jnp.log((self.zeta - self.gamma) / (rest - self.gamma) - 1.0)
                      ).astype(jnp.float32)

        # Hard-target mask precomputed ONCE (f32 compare, int8 stream -> 4x fewer bytes
        # per forward call than streaming f32 alpha).
        self.h_hard = (self.alpha >= 0.0).astype(jnp.int8)

    def __call__(self, x_oihw):
        oc = x_oihw.shape[0]
        x2d = x_oihw.reshape(oc, -1).astype(jnp.float32)
        h_stream = self.alpha if self.soft_targets else self.h_hard
        out2d = adaround_forward(
            x2d, h_stream, self.params,
            soft_targets=self.soft_targets,
            gamma=self.gamma, zeta=self.zeta,
        )
        return out2d.reshape(x_oihw.shape)

    # Pure-JAX reference using the PyTorch clamp order (validates the zp fold too).
    def reference(self, x_oihw):
        oc = x_oihw.shape[0]
        x = x_oihw.reshape(oc, -1).astype(jnp.float32)
        x_floor = jnp.floor(x * self.inv_delta)
        if self.soft_targets:
            h = jnp.clip(jax.nn.sigmoid(self.alpha) * (self.zeta - self.gamma)
                         + self.gamma, 0.0, 1.0)
        else:
            h = (self.alpha >= 0.0).astype(jnp.float32)
        x_quant = jnp.clip(x_floor + h + self.zero_point, 0.0,
                           float(self.n_levels - 1))
        return ((x_quant - self.zero_point) * self.delta).reshape(x_oihw.shape)


# ----------------------------------- main ------------------------------------


def _check(name, got, want, atol=1e-5, rtol=1e-5):
    if not bool(jnp.allclose(got, want, atol=atol, rtol=rtol)):
        err = float(jnp.max(jnp.abs(got - want)))
        raise AssertionError(f"{name} mismatch, max abs err = {err}")


if __name__ == "__main__":
    key = jax.random.PRNGKey(0)
    k1, k2 = jax.random.split(key)

    # 1) Tiny conv weight: OC=16, IC=4, KH=KW=3 (OIHW) -> full-extent blocks.
    w1 = jax.random.normal(k1, (16, 4, 3, 3), dtype=jnp.float32) * 0.5
    q1 = AdaRoundQuantizerJAX(w1, n_bits=4)

    q1.soft_targets = False
    out_hard = q1(w1)
    jax.block_until_ready(out_hard)
    _check("tiny/hard", out_hard, q1.reference(w1))

    q1.soft_targets = True
    out_soft = q1(w1)
    jax.block_until_ready(out_soft)
    _check("tiny/soft", out_soft, q1.reference(w1))

    # 2) Aligned conv weight: OC=64, IC=16, KH=KW=4 -> K=256; exercises the tiled
    #    no-padding path and the >=2-grid-step (megacore) split.
    w2 = jax.random.normal(k2, (64, 16, 4, 4), dtype=jnp.float32) * 0.25
    q2 = AdaRoundQuantizerJAX(w2, n_bits=4)

    q2.soft_targets = False
    out2_hard = q2(w2)
    jax.block_until_ready(out2_hard)
    _check("tiled/hard", out2_hard, q2.reference(w2))

    q2.soft_targets = True
    out2_soft = q2(w2)
    jax.block_until_ready(out2_soft)
    _check("tiled/soft", out2_soft, q2.reference(w2))

    # 3) Small-block call (2x2 grid) to exercise multi-step pipelining on both axes.
    oc2 = w2.shape[0]
    out2_small = adaround_forward(
        w2.reshape(oc2, -1).astype(jnp.float32), q2.h_hard, q2.params,
        soft_targets=False, gamma=q2.gamma, zeta=q2.zeta,
        block_rows=32, block_lanes=128,
    ).reshape(w2.shape)
    jax.block_until_ready(out2_small)
    q2.soft_targets = False
    _check("tiled/small-blocks", out2_small, q2.reference(w2))

    print("KERNEL_OK")
</pallas_src>

<mosaic_0001>
module attributes {stable_mosaic.version = 11 : i64} {
  func.func @_adaround_kernel(%arg0: i32, %arg1: i32, %arg2: memref<16x36xf32, #tpu.memory_space<vmem>>, %arg3: memref<16x36xi8, #tpu.memory_space<vmem>>, %arg4: memref<16x4xf32, #tpu.memory_space<vmem>>, %arg5: memref<16x36xf32, #tpu.memory_space<vmem>>) attributes {dimension_semantics = [#tpu.dimension_semantics<parallel>, #tpu.dimension_semantics<parallel>], iteration_bounds = array<i64: 1, 1>, scalar_prefetch = 0 : i64, scratch_operands = 0 : i64, tpu.core_type = #tpu.core_type<tc>, window_params = [{transform_indices = @transform_0, window_bounds = array<i64: 16, 36>}, {transform_indices = @transform_1, window_bounds = array<i64: 16, 36>}, {transform_indices = @transform_2, window_bounds = array<i64: 16, 4>}, {transform_indices = @transform_3, window_bounds = array<i64: 16, 36>}]} {
    %c0 = arith.constant 0 : index
    %c0_0 = arith.constant 0 : index
    %0 = vector.load %arg4[%c0, %c0_0] : memref<16x4xf32, #tpu.memory_space<vmem>>, vector<16x4xf32>
    %1 = vector.extract_strided_slice %0 {offsets = [0, 0], sizes = [16, 1], strides = [1, 1]} : vector<16x4xf32> to vector<16x1xf32>
    %2 = vector.extract_strided_slice %0 {offsets = [0, 1], sizes = [16, 1], strides = [1, 1]} : vector<16x4xf32> to vector<16x1xf32>
    %3 = vector.extract_strided_slice %0 {offsets = [0, 2], sizes = [16, 1], strides = [1, 1]} : vector<16x4xf32> to vector<16x1xf32>
    %4 = vector.extract_strided_slice %0 {offsets = [0, 3], sizes = [16, 1], strides = [1, 1]} : vector<16x4xf32> to vector<16x1xf32>
    %c0_1 = arith.constant 0 : index
    %c0_2 = arith.constant 0 : index
    %5 = vector.load %arg2[%c0_1, %c0_2] : memref<16x36xf32, #tpu.memory_space<vmem>>, vector<16x36xf32>
    %6 = vector.broadcast %1 : vector<16x1xf32> to vector<16x36xf32>
    %7 = arith.mulf %5, %6 : vector<16x36xf32>
    %8 = math.floor %7 : vector<16x36xf32>
    %c0_3 = arith.constant 0 : index
    %c0_4 = arith.constant 0 : index
    %9 = vector.load %arg3[%c0_3, %c0_4] : memref<16x36xi8, #tpu.memory_space<vmem>>, vector<16x36xi8>
    %10 = arith.sitofp %9 : vector<16x36xi8> to vector<16x36xf32>
    %11 = arith.addf %8, %10 : vector<16x36xf32>
    %12 = vector.broadcast %3 : vector<16x1xf32> to vector<16x36xf32>
    %13 = arith.maximumf %12, %11 : vector<16x36xf32>
    %14 = vector.broadcast %4 : vector<16x1xf32> to vector<16x36xf32>
    %15 = arith.minimumf %14, %13 : vector<16x36xf32>
    %16 = vector.broadcast %2 : vector<16x1xf32> to vector<16x36xf32>
    %17 = arith.mulf %15, %16 : vector<16x36xf32>
    %c0_5 = arith.constant 0 : index
    %c0_6 = arith.constant 0 : index
    %18 = vector.load %arg5[%c0_5, %c0_6] : memref<16x36xf32, #tpu.memory_space<vmem>>, vector<16x36xf32>
    tpu.vector_store %arg5[%c0_5, %c0_6], %17 {strides = array<i32>} : memref<16x36xf32, #tpu.memory_space<vmem>>, vector<16x36xf32>,
    return
  }
  func.func @transform_0(%arg0: i32, %arg1: i32) -> (i32, i32) {
    %c0_i32 = arith.constant 0 : i32
    return %arg0, %arg1 : i32, i32
  }
  func.func @transform_1(%arg0: i32, %arg1: i32) -> (i32, i32) {
    %c0_i32 = arith.constant 0 : i32
    return %arg0, %arg1 : i32, i32
  }
  func.func @transform_2(%arg0: i32, %arg1: i32) -> (i32, i32) {
    %c0_i32 = arith.constant 0 : i32
    %c0_i32_0 = arith.constant 0 : i32
    return %arg0, %c0_i32 : i32, i32
  }
  func.func @transform_3(%arg0: i32, %arg1: i32) -> (i32, i32) {
    %c0_i32 = arith.constant 0 : i32
    return %arg0, %arg1 : i32, i32
  }
}

</mosaic_0001>

<llo_original>
// kernel: tpu_custom_call.1
$region0: #{tpu_custom_call.1}
  #allocation0 [shape = 'u32[]', space=smem, size = 0x4, offset = 0x4, fixed_abs, tag = 'smem constant byte address 0x4 - core index']
  #allocation1 [shape = 'u32[72,128]{1,0:T(1,128)}', space=vmem, size = 0x9000, scoped, tag = 'internal scratch']
  %s0 = inlined_call_operand.vmem [shape: f32[16,36], index: 0, kind: input, shape index: {}]
  %s1 = inlined_call_operand.vmem [shape: s8[16,36], index: 1, kind: input, shape index: {}]
  %s2 = inlined_call_operand.vmem [shape: f32[16,4], index: 2, kind: input, shape index: {}]
  %s3 = inlined_call_operand.hbm [shape: f32[16,36], index: 3, kind: output, shape index: {}]
  %s4 = sld [smem:[#allocation0]]
  $region22: #{tpu_custom_call.1} parent=0
    _
  %s6 = ssub.s32 1, %s4
  %s7 = scalar_select 0, %s6, %s4
  $region1: #{tpu_custom_call.1} parent=0
    #allocation2 [shape = 'u8[8192]{0}', space=vmem, size = 0x2000, scoped, tag = 'output window, operand 0, single buffered']
    #allocation3 [shape = 's32[1]{0}', space=sflag, size = 0x4, scoped, tag = 'scoped memory for tpu_custom_call.1']
    %8 = vsyncpa [#allocation3], 0
    // Predicated region
    $region2: #{tpu_custom_call.1} parent=1 // pred_check
      _
    $region3: #{tpu_custom_call.1} parent=1 // pred_check_branch
      %10 = sbr.rel (0) target = $region5
    $region4: #{tpu_custom_call.1} parent=1 // pred_region
      _
    $region5: #{tpu_custom_call.1} parent=1 // pred_fallthru
      _
    // Predicated region
    $region6: #{tpu_custom_call.1} parent=1 // pred_check
      _
    $region7: #{tpu_custom_call.1} parent=1 // pred_check_branch
      %12 = sbr.rel (0) target = $region9
    $region8: #{tpu_custom_call.1} parent=1 // pred_region
      _
    $region9: #{tpu_custom_call.1} parent=1 // pred_fallthru
      _
    // Predicated region
    $region10: #{tpu_custom_call.1} parent=1 // pred_check
      _
    $region11: #{tpu_custom_call.1} parent=1 // pred_check_branch
      %14 = sbr.rel (0) target = $region13
    $region12: #{tpu_custom_call.1} parent=1 // pred_region
      _
    $region13: #{tpu_custom_call.1} parent=1 // pred_fallthru
      _
    %v15 = vld [vmem:[%s2] sm:$0xff]
    %v16 = vld [vmem:[%s2 + $0x8] sm:$0xff]
    %v17 = vld [vmem:[%s0] sm:$0xff]
    %v18 = vld [vmem:[%s0 + $0x8] sm:$0xff]
    %20 = vset.pattern.permute.xlu0 0
    %21 = vperm.xlu0 %20, %v15
    %v22 = vpop.permute.xlu0 %21
    %25 = vset.pattern.permute.xlu0 0
    %26 = vperm.xlu0 %25, %v16
    %v27 = vpop.permute.xlu0 %26
    %v29 = vmul.f32 %v17, %v22
    %v30 = vmul.f32 %v18, %v27
    %v31 = vfloor.f32 %v29
    %v32 = vfloor.f32 %v30
    %v33 = vld [vmem:[%s1] sm:$0x3]
    %v34 = vld [vmem:[%s1 + $0x2] sm:$0x3]
    %v35 = vunpack.c.0.s8 %v33
    %v36 = vunpack.c.0.s8 %v34
    %v37 = vcvt.s32.f32 %v35
    %v38 = vcvt.s32.f32 %v36
    %v39 = vadd.f32 %v31, %v37
    %v40 = vadd.f32 %v32, %v38
    %41 = vset.pattern.permute.xlu0 2
    %42 = vperm.xlu0 %41, %v15
    %v43 = vpop.permute.xlu0 %42
    %45 = vset.pattern.permute.xlu0 2
    %46 = vperm.xlu0 %45, %v16
    %v47 = vpop.permute.xlu0 %46
    %v49 = vmax.f32 %v43, %v39
    %v50 = vmax.f32 %v47, %v40
    %51 = vset.pattern.permute.xlu0 3
    %52 = vperm.xlu0 %51, %v15
    %v53 = vpop.permute.xlu0 %52
    %55 = vset.pattern.permute.xlu0 3
    %56 = vperm.xlu0 %55, %v16
    %v57 = vpop.permute.xlu0 %56
    %v59 = vmin.f32 %v53, %v49
    %v60 = vmin.f32 %v57, %v50
    %61 = vset.pattern.permute.xlu0 1
    %62 = vperm.xlu0 %61, %v15
    %v63 = vpop.permute.xlu0 %62
    %65 = vset.pattern.permute.xlu0 1
    %66 = vperm.xlu0 %65, %v16
    %v67 = vpop.permute.xlu0 %66
    %v69 = vmul.f32 %v59, %v63
    %v70 = vmul.f32 %v60, %v67
    %vm71 = vcmask 293888
    %72 = vst.msk [vmem:[#allocation2] sm:$0xff] %vm71, %v69
    %73 = vst.msk [vmem:[#allocation2 + $0x8] sm:$0xff] %vm71, %v70
    // Predicated region
    $region14: #{tpu_custom_call.1} parent=1 // pred_check
      _
    $region15: #{tpu_custom_call.1} parent=1 // pred_check_branch
      %75 = sbr.rel (0) target = $region17
    $region16: #{tpu_custom_call.1} parent=1 // pred_region
      %77 = vsyncadd [#allocation3], 0
      %s78 = sshll.u32 [#allocation2], 4
      %s79 = int_to_ptr.vmem [resolvable:$true] %s78
      %s80 = sshll.u32 %s3, 4
      %s81 = int_to_ptr.hbm [resolvable:$true] %s80
      %86 = dma.vmem_to_hbm [thread:$0]  %s79, 256, %s81, [#allocation3], 128, 128, 8
    $region17: #{tpu_custom_call.1} parent=1 // pred_fallthru
      _
    // Predicated region
    $region18: #{tpu_custom_call.1} parent=1 // pred_check
      _
    $region19: #{tpu_custom_call.1} parent=1 // pred_check_branch
      %88 = sbr.rel (0) target = $region21
    $region20: #{tpu_custom_call.1} parent=1 // pred_region
      %90 = dma.done [#allocation3], 256
    $region21: #{tpu_custom_call.1} parent=1 // pred_fallthru
      _
    %91 = vsyncpa [#allocation3], 1

</llo_original>
